<compile_context>
chip_gen: v7x
topology: tpu7x:2x2x1
jax: 0.10.0
libtpu: 0.0.40
codegen_flags: <defaults>
</compile_context>

<pallas_src>
import jax
import jax.numpy as jnp
from jax import lax
from jax.experimental import pallas as pl
from jax.experimental.pallas import tpu as pltpu


LANE = 128  # each gate block padded to one full 128-lane vreg width


def _round_up(x, m):
    return (x + m - 1) // m * m


def _vmem_limit_bytes():
    # ~75% of physical VMEM (96 MiB on v5e/v6e, 48 MiB on v7x), capped at 100 MiB.
    try:
        cap = pltpu.get_tpu_info().vmem_capacity_bytes
        return min(int(cap * 3 // 4), 100 * 1024 * 1024)
    except Exception:
        return 48 * 1024 * 1024


def lstm_last_hidden_kernel(tmax_ref, len_ref, x_ref, wih_ref, whh_ref, b_ref,
                            out_ref, gx_ref, h_ref, c_ref):
    """One (batch-tile, time-chunk) grid step of the LSTM recurrence.

    tmax_ref: (n_btiles,) int32 SMEM  per-batch-tile max(lengths) (scalar prefetch)
    len_ref:  (Bt, 1)   int32        valid lengths for this batch tile
    x_ref:    (Tc, Bt, E) bf16       time-major embedded inputs for this time chunk
    wih_ref:  (E, 4*Hp)  bf16        W_ih^T, gate blocks padded to 128 lanes (i,f,g,o)
    whh_ref:  (Hp, 4*Hp) bf16        W_hh^T, same padding
    b_ref:    (1, 4*Hp)  f32         b_ih + b_hh, same padding
    out_ref:  (Bt, Hp)   f32         final hidden state (lane-dense store)
    gx_ref:   (Tc, Bt, 4*Hp) bf16    scratch: per-chunk hoisted input projection
    h_ref:    (Bt, Hp)   bf16        scratch: hidden state, persists across time chunks
    c_ref:    (Bt, Hp)   f32         scratch: cell state, persists across time chunks
    """
    b_idx = pl.program_id(0)
    t_idx = pl.program_id(1)
    n_tchunks = pl.num_programs(1)

    Tc, Bt, E = x_ref.shape
    Hp4 = wih_ref.shape[1]
    Hp = Hp4 // 4

    @pl.when(t_idx == 0)
    def _():
        h_ref[...] = jnp.zeros_like(h_ref)
        c_ref[...] = jnp.zeros_like(c_ref)

    tile_max = tmax_ref[b_idx]          # max length within this batch tile
    chunk_start = t_idx * Tc

    @pl.when(chunk_start < tile_max)    # skip whole chunks past this tile's max length
    def _():
        # ---- Hoisted input projection for this chunk: one MXU GEMM + bias ----
        x_all = x_ref[...].reshape(Tc * Bt, E)                                  # bf16
        gx = jnp.dot(x_all, wih_ref[...], preferred_element_type=jnp.float32)   # f32
        gx_ref[...] = (gx + b_ref[...]).astype(jnp.bfloat16).reshape(Tc, Bt, Hp4)

        lens = len_ref[...]             # (Bt, 1) int32
        whh = whh_ref[...]              # (Hp, 4Hp) bf16
        steps = jnp.minimum(tile_max - chunk_start, Tc)

        def step(t, carry):
            h, c = carry                # h: (Bt,Hp) bf16, c: (Bt,Hp) f32
            gates = gx_ref[t].astype(jnp.float32) + jnp.dot(
                h, whh, preferred_element_type=jnp.float32)
            # Gate slices land exactly on 128-lane block boundaries (Hp = k*128).
            i = jax.nn.sigmoid(gates[:, 0 * Hp:1 * Hp])
            f = jax.nn.sigmoid(gates[:, 1 * Hp:2 * Hp])
            g = jnp.tanh(gates[:, 2 * Hp:3 * Hp])
            o = jax.nn.sigmoid(gates[:, 3 * Hp:4 * Hp])
            c_new = f * c + i * g
            h_new = o * jnp.tanh(c_new)
            # Freeze h/c past each sequence's length -> packed-sequence h_n semantics.
            valid = (chunk_start + t) < lens                 # (Bt,1) -> bcast over Hp
            h = jnp.where(valid, h_new.astype(jnp.bfloat16), h)
            c = jnp.where(valid, c_new, c)
            return h, c

        h_fin, c_fin = lax.fori_loop(0, steps, step, (h_ref[...], c_ref[...]))
        h_ref[...] = h_fin
        c_ref[...] = c_fin

    @pl.when(t_idx == n_tchunks - 1)
    def _():
        out_ref[...] = h_ref[...].astype(jnp.float32)


@jax.jit
def ter_rnn_encode(tokens, lengths, emb_table, w_ih, w_hh, b_ih, b_hh):
    """JAX wrapper matching the encoder forward (eval mode, LSTM, 1 layer, unidir)."""
    B, T = tokens.shape
    E = emb_table.shape[1]
    H = w_hh.shape[1]
    Hp = _round_up(H, LANE)

    # Batch tile: fill the MXU row dimension when possible; sublane-aligned otherwise.
    b_tile = 128 if B >= 128 else _round_up(B, 8)
    Bp = _round_up(B, b_tile)
    n_btiles = Bp // b_tile

    # Time chunk: bounds VMEM independently of T.
    t_chunk = 32 if T > 32 else T
    Tp = _round_up(T, t_chunk)
    n_tchunks = Tp // t_chunk

    lens = lengths.astype(jnp.int32)
    # Sort batch by length, descending (pack_padded_sequence semantics); unsort at end.
    order = jnp.argsort(-lens)
    tokens_s = jnp.take(tokens, order, axis=0)
    lens_s = jnp.take(lens, order)

    # Glue: embedding lookup + layout plumbing in plain JAX.
    x = jnp.take(emb_table, tokens_s, axis=0)                 # (B, T, E)
    x_tm = jnp.transpose(x, (1, 0, 2))                        # (T, B, E) time-major
    x_tm = jnp.pad(x_tm, ((0, Tp - T), (0, Bp - B), (0, 0))).astype(jnp.bfloat16)

    lens_p = jnp.pad(lens_s, (0, Bp - B)).reshape(Bp, 1)      # padded rows: length 0
    # Per-batch-tile max length -> per-tile loop bound / chunk skipping.
    tile_max = jnp.max(lens_p.reshape(n_btiles, b_tile), axis=1).astype(jnp.int32)

    # Pad each gate's H columns out to a full 128-lane block (vreg-aligned gate math).
    # NOTE: zero padding here + zero h0/c0 is what keeps padded lanes inert (see header).
    wih_t = w_ih.T                                            # (E, 4H), gate order i,f,g,o
    whh_t = w_hh.T                                            # (H, 4H)
    bias = b_ih + b_hh                                        # (4H,)
    wih_p = jnp.zeros((E, 4 * Hp), jnp.float32)
    whh_p = jnp.zeros((Hp, 4 * Hp), jnp.float32)
    bias_p = jnp.zeros((1, 4 * Hp), jnp.float32)
    for k in range(4):
        wih_p = wih_p.at[:, k * Hp:k * Hp + H].set(wih_t[:, k * H:(k + 1) * H])
        whh_p = whh_p.at[:H, k * Hp:k * Hp + H].set(whh_t[:, k * H:(k + 1) * H])
        bias_p = bias_p.at[:, k * Hp:k * Hp + H].set(bias[k * H:(k + 1) * H])
    wih_p = wih_p.astype(jnp.bfloat16)
    whh_p = whh_p.astype(jnp.bfloat16)

    grid = (n_btiles, n_tchunks)
    out = pl.pallas_call(
        lstm_last_hidden_kernel,
        out_shape=jax.ShapeDtypeStruct((Bp, Hp), jnp.float32),
        grid_spec=pltpu.PrefetchScalarGridSpec(
            num_scalar_prefetch=1,                            # per-tile max lens -> SMEM
            grid=grid,
            in_specs=[
                pl.BlockSpec((b_tile, 1), lambda b, t, tm: (b, 0)),            # lengths
                pl.BlockSpec((t_chunk, b_tile, E), lambda b, t, tm: (t, b, 0)),  # x bf16
                pl.BlockSpec((E, 4 * Hp), lambda b, t, tm: (0, 0)),            # W_ih^T
                pl.BlockSpec((Hp, 4 * Hp), lambda b, t, tm: (0, 0)),           # W_hh^T
                pl.BlockSpec((1, 4 * Hp), lambda b, t, tm: (0, 0)),            # bias
            ],
            out_specs=pl.BlockSpec((b_tile, Hp), lambda b, t, tm: (b, 0)),
            scratch_shapes=[
                pltpu.VMEM((t_chunk, b_tile, 4 * Hp), jnp.bfloat16),  # gx (per chunk)
                pltpu.VMEM((b_tile, Hp), jnp.bfloat16),               # h (persistent)
                pltpu.VMEM((b_tile, Hp), jnp.float32),                # c (persistent)
            ],
        ),
        compiler_params=pltpu.CompilerParams(
            # batch tiles independent (megacore-shardable); time axis carries state.
            dimension_semantics=("parallel", "arbitrary"),
            vmem_limit_bytes=_vmem_limit_bytes(),
        ),
    )(tile_max, lens_p, x_tm, wih_p, whh_p, bias_p)

    out_sorted = out[:B, :H]                                  # (B, H) in sorted order
    # Unsort back to the caller's batch order.
    return jnp.zeros((B, H), out_sorted.dtype).at[order].set(out_sorted)


def reference_forward(tokens, lengths, emb_table, w_ih, w_hh, b_ih, b_hh):
    """Pure-JAX f32 reference of the same forward pass (for correctness check)."""
    B, T = tokens.shape
    H = w_hh.shape[1]
    x = jnp.take(emb_table, tokens, axis=0)                   # (B, T, E)
    lens = lengths.astype(jnp.int32).reshape(B, 1)

    def step(carry, t):
        h, c = carry
        x_t = x[:, t, :]
        gates = x_t @ w_ih.T + h @ w_hh.T + (b_ih + b_hh)
        i = jax.nn.sigmoid(gates[:, 0 * H:1 * H])
        f = jax.nn.sigmoid(gates[:, 1 * H:2 * H])
        g = jnp.tanh(gates[:, 2 * H:3 * H])
        o = jax.nn.sigmoid(gates[:, 3 * H:4 * H])
        c_new = f * c + i * g
        h_new = o * jnp.tanh(c_new)
        valid = t < lens
        return (jnp.where(valid, h_new, h), jnp.where(valid, c_new, c)), None

    (h, _), _ = lax.scan(step, (jnp.zeros((B, H)), jnp.zeros((B, H))), jnp.arange(T))
    return h


if __name__ == "__main__":
    # Module hyperparameters (emb_size must equal ninp per the PyTorch ctor check).
    NTOKEN = 50
    EMB = NINP = 32
    NHID = 32
    B, T = 4, 8

    key = jax.random.PRNGKey(0)
    k_emb, k_wih, k_whh, k_bih, k_bhh, k_tok = jax.random.split(key, 6)

    # nn.init.uniform_(embedding.weight, -0.1, 0.1)
    emb_table = jax.random.uniform(k_emb, (NTOKEN, EMB), jnp.float32, -0.1, 0.1)
    # nn.LSTM default init: U(-1/sqrt(H), 1/sqrt(H)); gate order i, f, g, o.
    bound = 1.0 / (NHID ** 0.5)
    w_ih = jax.random.uniform(k_wih, (4 * NHID, NINP), jnp.float32, -bound, bound)
    w_hh = jax.random.uniform(k_whh, (4 * NHID, NHID), jnp.float32, -bound, bound)
    b_ih = jax.random.uniform(k_bih, (4 * NHID,), jnp.float32, -bound, bound)
    b_hh = jax.random.uniform(k_bhh, (4 * NHID,), jnp.float32, -bound, bound)

    tokens = jax.random.randint(k_tok, (B, T), 0, NTOKEN - 1, dtype=jnp.int32)
    lengths = jnp.array([8, 5, 3, 7], dtype=jnp.int32)        # valid lengths <= T

    out = ter_rnn_encode(tokens, lengths, emb_table, w_ih, w_hh, b_ih, b_hh)
    out = jax.block_until_ready(out)

    ref = reference_forward(tokens, lengths, emb_table, w_ih, w_hh, b_ih, b_hh)
    assert out.shape == (B, NHID)
    # bf16 matmul inputs / bf16 h carry with f32 cell + f32 accumulation -> small drift
    # vs pure-f32 reference (re-validate tolerance at realistic T for production use).
    assert jnp.allclose(out, ref, rtol=2e-2, atol=2e-2), "mismatch vs pure-JAX reference"

    print("KERNEL_OK")
</pallas_src>

<mosaic_0001>
module attributes {stable_mosaic.version = 11 : i64} {
  func.func @lstm_last_hidden_kernel(%arg0: i32, %arg1: i32, %arg2: memref<1xi32, #tpu.memory_space<smem>>, %arg3: memref<8x1xi32, #tpu.memory_space<vmem>>, %arg4: memref<8x8x32xbf16, #tpu.memory_space<vmem>>, %arg5: memref<32x512xbf16, #tpu.memory_space<vmem>>, %arg6: memref<128x512xbf16, #tpu.memory_space<vmem>>, %arg7: memref<1x512xf32, #tpu.memory_space<vmem>>, %arg8: memref<8x128xf32, #tpu.memory_space<vmem>>, %arg9: memref<8x8x512xbf16, #tpu.memory_space<vmem>>, %arg10: memref<8x128xbf16, #tpu.memory_space<vmem>>, %arg11: memref<8x128xf32, #tpu.memory_space<vmem>>) attributes {dimension_semantics = [#tpu.dimension_semantics<parallel>, #tpu.dimension_semantics<arbitrary>], iteration_bounds = array<i64: 1, 1>, scalar_prefetch = 1 : i64, scratch_operands = 3 : i64, tpu.core_type = #tpu.core_type<tc>, window_params = [{transform_indices = @transform_0, window_bounds = array<i64: 8, 1>}, {transform_indices = @transform_1, window_bounds = array<i64: 8, 8, 32>}, {pipeline_mode = #tpu.pipeline_mode<synchronous>, transform_indices = @transform_2, window_bounds = array<i64: 32, 512>}, {pipeline_mode = #tpu.pipeline_mode<synchronous>, transform_indices = @transform_3, window_bounds = array<i64: 128, 512>}, {pipeline_mode = #tpu.pipeline_mode<synchronous>, transform_indices = @transform_4, window_bounds = array<i64: 1, 512>}, {transform_indices = @transform_5, window_bounds = array<i64: 8, 128>}]} {
    %c0_i32 = arith.constant 0 : i32
    %0 = arith.cmpi eq, %arg1, %c0_i32 : i32
    %1 = arith.extui %0 : i1 to i32
    %c0_i32_0 = arith.constant 0 : i32
    %2 = arith.cmpi ne, %1, %c0_i32_0 : i32
    scf.if %2 {
      %cst = arith.constant 0.000000e+00 : bf16
      %12 = vector.broadcast %cst : bf16 to vector<8x128xbf16>
      %c0 = arith.constant 0 : index
      %c0_4 = arith.constant 0 : index
      %13 = vector.load %arg10[%c0, %c0_4] : memref<8x128xbf16, #tpu.memory_space<vmem>>, vector<8x128xbf16>
      tpu.vector_store %arg10[%c0, %c0_4], %12 {strides = array<i32>} : memref<8x128xbf16, #tpu.memory_space<vmem>>, vector<8x128xbf16>,
      %cst_5 = arith.constant 0.000000e+00 : f32
      %14 = vector.broadcast %cst_5 : f32 to vector<8x128xf32>
      %c0_6 = arith.constant 0 : index
      %c0_7 = arith.constant 0 : index
      %15 = vector.load %arg11[%c0_6, %c0_7] : memref<8x128xf32, #tpu.memory_space<vmem>>, vector<8x128xf32>
      tpu.vector_store %arg11[%c0_6, %c0_7], %14 {strides = array<i32>} : memref<8x128xf32, #tpu.memory_space<vmem>>, vector<8x128xf32>,
    } else {
    }
    %3 = arith.index_cast %arg0 : i32 to index
    %4 = memref.load %arg2[%3] : memref<1xi32, #tpu.memory_space<smem>>
    %c8_i32 = arith.constant 8 : i32
    %5 = arith.muli %arg1, %c8_i32 : i32
    %6 = arith.cmpi slt, %5, %4 : i32
    %7 = arith.extui %6 : i1 to i32
    %c0_i32_1 = arith.constant 0 : i32
    %8 = arith.cmpi ne, %7, %c0_i32_1 : i32
    scf.if %8 {
      %c0 = arith.constant 0 : index
      %c0_4 = arith.constant 0 : index
      %c0_5 = arith.constant 0 : index
      %12 = vector.load %arg4[%c0, %c0_4, %c0_5] : memref<8x8x32xbf16, #tpu.memory_space<vmem>>, vector<8x8x32xbf16>
      %13 = vector.shape_cast %12 : vector<8x8x32xbf16> to vector<64x32xbf16>
      %c0_6 = arith.constant 0 : index
      %c0_7 = arith.constant 0 : index
      %14 = vector.load %arg5[%c0_6, %c0_7] : memref<32x512xbf16, #tpu.memory_space<vmem>>, vector<32x512xbf16>
      %cst = arith.constant dense<0.000000e+00> : vector<64x512xf32>
      %15 = tpu.matmul %13, %14, %cst {dimension_numbers = #tpu.dot_dimension_numbers<[1], [0], [0], [1], [0, 0, 1, 1], [], []>} : vector<64x32xbf16>, vector<32x512xbf16>, vector<64x512xf32> -> vector<64x512xf32>
      %c0_8 = arith.constant 0 : index
      %c0_9 = arith.constant 0 : index
      %16 = vector.load %arg7[%c0_8, %c0_9] : memref<1x512xf32, #tpu.memory_space<vmem>>, vector<1x512xf32>
      %17 = vector.broadcast %16 : vector<1x512xf32> to vector<64x512xf32>
      %18 = arith.addf %15, %17 : vector<64x512xf32>
      %19 = arith.truncf %18 : vector<64x512xf32> to vector<64x512xbf16>
      %20 = vector.shape_cast %19 : vector<64x512xbf16> to vector<8x8x512xbf16>
      %c0_10 = arith.constant 0 : index
      %c0_11 = arith.constant 0 : index
      %c0_12 = arith.constant 0 : index
      %21 = vector.load %arg9[%c0_10, %c0_11, %c0_12] : memref<8x8x512xbf16, #tpu.memory_space<vmem>>, vector<8x8x512xbf16>
      tpu.vector_store %arg9[%c0_10, %c0_11, %c0_12], %20 {strides = array<i32>} : memref<8x8x512xbf16, #tpu.memory_space<vmem>>, vector<8x8x512xbf16>,
      %c0_13 = arith.constant 0 : index
      %c0_14 = arith.constant 0 : index
      %22 = vector.load %arg3[%c0_13, %c0_14] : memref<8x1xi32, #tpu.memory_space<vmem>>, vector<8x1xi32>
      %c0_15 = arith.constant 0 : index
      %c0_16 = arith.constant 0 : index
      %23 = vector.load %arg6[%c0_15, %c0_16] : memref<128x512xbf16, #tpu.memory_space<vmem>>, vector<128x512xbf16>
      %24 = arith.subi %4, %5 : i32
      %c8_i32_17 = arith.constant 8 : i32
      %25 = arith.minsi %24, %c8_i32_17 : i32
      %c0_18 = arith.constant 0 : index
      %c0_19 = arith.constant 0 : index
      %26 = vector.load %arg10[%c0_18, %c0_19] : memref<8x128xbf16, #tpu.memory_space<vmem>>, vector<8x128xbf16>
      %c0_20 = arith.constant 0 : index
      %c0_21 = arith.constant 0 : index
      %27 = vector.load %arg11[%c0_20, %c0_21] : memref<8x128xf32, #tpu.memory_space<vmem>>, vector<8x128xf32>
      %c0_i32_22 = arith.constant 0 : i32
      %28 = arith.subi %25, %c0_i32_22 : i32
      %29 = arith.addi %c0_i32_22, %28 : i32
      %c1_i32 = arith.constant 1 : i32
      %30:2 = scf.for %arg12 = %c0_i32_22 to %29 step %c1_i32 iter_args(%arg13 = %26, %arg14 = %27) -> (vector<8x128xbf16>, vector<8x128xf32>)  : i32 {
        %33 = arith.index_cast %arg12 : i32 to index
        %c0_27 = arith.constant 0 : index
        %c0_28 = arith.constant 0 : index
        %34 = vector.load %arg9[%33, %c0_27, %c0_28] : memref<8x8x512xbf16, #tpu.memory_space<vmem>>, vector<1x8x512xbf16>
        %35 = vector.shape_cast %34 : vector<1x8x512xbf16> to vector<8x512xbf16>
        %36 = arith.extf %35 : vector<8x512xbf16> to vector<8x512xf32>
        %cst_29 = arith.constant dense<0.000000e+00> : vector<8x512xf32>
        %37 = tpu.matmul %arg13, %23, %cst_29 {dimension_numbers = #tpu.dot_dimension_numbers<[1], [0], [0], [1], [0, 0, 1, 1], [], []>} : vector<8x128xbf16>, vector<128x512xbf16>, vector<8x512xf32> -> vector<8x512xf32>
        %38 = arith.addf %36, %37 : vector<8x512xf32>
        %39 = vector.extract_strided_slice %38 {offsets = [0, 0], sizes = [8, 128], strides = [1, 1]} : vector<8x512xf32> to vector<8x128xf32>
        %40 = arith.negf %39 : vector<8x128xf32>
        %41 = math.exp %40 : vector<8x128xf32>
        %cst_30 = arith.constant 1.000000e+00 : f32
        %42 = vector.broadcast %cst_30 : f32 to vector<8x128xf32>
        %43 = arith.addf %42, %41 : vector<8x128xf32>
        %44 = arith.divf %42, %43 : vector<8x128xf32>
        %45 = vector.extract_strided_slice %38 {offsets = [0, 128], sizes = [8, 128], strides = [1, 1]} : vector<8x512xf32> to vector<8x128xf32>
        %46 = arith.negf %45 : vector<8x128xf32>
        %47 = math.exp %46 : vector<8x128xf32>
        %cst_31 = arith.constant 1.000000e+00 : f32
        %48 = vector.broadcast %cst_31 : f32 to vector<8x128xf32>
        %49 = arith.addf %48, %47 : vector<8x128xf32>
        %50 = arith.divf %48, %49 : vector<8x128xf32>
        %51 = vector.extract_strided_slice %38 {offsets = [0, 256], sizes = [8, 128], strides = [1, 1]} : vector<8x512xf32> to vector<8x128xf32>
        %52 = math.tanh %51 : vector<8x128xf32>
        %53 = vector.extract_strided_slice %38 {offsets = [0, 384], sizes = [8, 128], strides = [1, 1]} : vector<8x512xf32> to vector<8x128xf32>
        %54 = arith.negf %53 : vector<8x128xf32>
        %55 = math.exp %54 : vector<8x128xf32>
        %cst_32 = arith.constant 1.000000e+00 : f32
        %56 = vector.broadcast %cst_32 : f32 to vector<8x128xf32>
        %57 = arith.addf %56, %55 : vector<8x128xf32>
        %58 = arith.divf %56, %57 : vector<8x128xf32>
        %59 = arith.mulf %50, %arg14 : vector<8x128xf32>
        %60 = arith.mulf %44, %52 : vector<8x128xf32>
        %61 = arith.addf %59, %60 : vector<8x128xf32>
        %62 = math.tanh %61 : vector<8x128xf32>
        %63 = arith.mulf %58, %62 : vector<8x128xf32>
        %64 = arith.addi %5, %arg12 : i32
        %65 = vector.broadcast %64 : i32 to vector<8x1xi32>
        %66 = arith.cmpi slt, %65, %22 : vector<8x1xi32>
        %67 = arith.truncf %63 : vector<8x128xf32> to vector<8x128xbf16>
        %68 = vector.shape_cast %66 : vector<8x1xi1> to vector<8x1xi1>
        %69 = vector.broadcast %68 : vector<8x1xi1> to vector<8x128xi1>
        %70 = arith.select %69, %67, %arg13 : vector<8x128xi1>, vector<8x128xbf16>
        %71 = vector.shape_cast %66 : vector<8x1xi1> to vector<8x1xi1>
        %72 = vector.broadcast %71 : vector<8x1xi1> to vector<8x128xi1>
        %73 = arith.select %72, %61, %arg14 : vector<8x128xi1>, vector<8x128xf32>
        scf.yield %70, %73 : vector<8x128xbf16>, vector<8x128xf32>
      }
      %c0_23 = arith.constant 0 : index
      %c0_24 = arith.constant 0 : index
      %31 = vector.load %arg10[%c0_23, %c0_24] : memref<8x128xbf16, #tpu.memory_space<vmem>>, vector<8x128xbf16>
      tpu.vector_store %arg10[%c0_23, %c0_24], %30#0 {strides = array<i32>} : memref<8x128xbf16, #tpu.memory_space<vmem>>, vector<8x128xbf16>,
      %c0_25 = arith.constant 0 : index
      %c0_26 = arith.constant 0 : index
      %32 = vector.load %arg11[%c0_25, %c0_26] : memref<8x128xf32, #tpu.memory_space<vmem>>, vector<8x128xf32>
      tpu.vector_store %arg11[%c0_25, %c0_26], %30#1 {strides = array<i32>} : memref<8x128xf32, #tpu.memory_space<vmem>>, vector<8x128xf32>,
    } else {
    }
    %c0_i32_2 = arith.constant 0 : i32
    %9 = arith.cmpi eq, %arg1, %c0_i32_2 : i32
    %10 = arith.extui %9 : i1 to i32
    %c0_i32_3 = arith.constant 0 : i32
    %11 = arith.cmpi ne, %10, %c0_i32_3 : i32
    scf.if %11 {
      %c0 = arith.constant 0 : index
      %c0_4 = arith.constant 0 : index
      %12 = vector.load %arg10[%c0, %c0_4] : memref<8x128xbf16, #tpu.memory_space<vmem>>, vector<8x128xbf16>
      %13 = arith.extf %12 : vector<8x128xbf16> to vector<8x128xf32>
      %c0_5 = arith.constant 0 : index
      %c0_6 = arith.constant 0 : index
      %14 = vector.load %arg8[%c0_5, %c0_6] : memref<8x128xf32, #tpu.memory_space<vmem>>, vector<8x128xf32>
      tpu.vector_store %arg8[%c0_5, %c0_6], %13 {strides = array<i32>} : memref<8x128xf32, #tpu.memory_space<vmem>>, vector<8x128xf32>,
    } else {
    }
    return
  }
  func.func @transform_0(%arg0: i32, %arg1: i32, %arg2: memref<1xi32, #tpu.memory_space<smem>>) -> (i32, i32) {
    %c0_i32 = arith.constant 0 : i32
    %c0_i32_0 = arith.constant 0 : i32
    return %arg0, %c0_i32 : i32, i32
  }
  func.func @transform_1(%arg0: i32, %arg1: i32, %arg2: memref<1xi32, #tpu.memory_space<smem>>) -> (i32, i32, i32) {
    %c0_i32 = arith.constant 0 : i32
    %c0_i32_0 = arith.constant 0 : i32
    return %arg1, %arg0, %c0_i32 : i32, i32, i32
  }
  func.func @transform_2(%arg0: i32, %arg1: i32, %arg2: memref<1xi32, #tpu.memory_space<smem>>) -> (i32, i32) {
    %c0_i32 = arith.constant 0 : i32
    %c0_i32_0 = arith.constant 0 : i32
    %c0_i32_1 = arith.constant 0 : i32
    return %c0_i32, %c0_i32_0 : i32, i32
  }
  func.func @transform_3(%arg0: i32, %arg1: i32, %arg2: memref<1xi32, #tpu.memory_space<smem>>) -> (i32, i32) {
    %c0_i32 = arith.constant 0 : i32
    %c0_i32_0 = arith.constant 0 : i32
    %c0_i32_1 = arith.constant 0 : i32
    return %c0_i32, %c0_i32_0 : i32, i32
  }
  func.func @transform_4(%arg0: i32, %arg1: i32, %arg2: memref<1xi32, #tpu.memory_space<smem>>) -> (i32, i32) {
    %c0_i32 = arith.constant 0 : i32
    %c0_i32_0 = arith.constant 0 : i32
    %c0_i32_1 = arith.constant 0 : i32
    return %c0_i32, %c0_i32_0 : i32, i32
  }
  func.func @transform_5(%arg0: i32, %arg1: i32, %arg2: memref<1xi32, #tpu.memory_space<smem>>) -> (i32, i32) {
    %c0_i32 = arith.constant 0 : i32
    %c0_i32_0 = arith.constant 0 : i32
    return %arg0, %c0_i32 : i32, i32
  }
}

</mosaic_0001>

<llo_original>
// kernel: neg.1
$region0: #{neg.1}
  #allocation0 [shape = 's32[1]{0}', space=sflag, size = 0x4, scoped, tag = 'scoped memory for neg.1']
  %s0 = inlined_call_operand.vmem [shape: s32[4], index: 0, kind: input, shape index: {}]
  %s1 = inlined_call_operand.vmem [shape: s32[4], index: 1, kind: output, shape index: {}]
  %v2 = vld [vmem:[%s0] sm:$0x1]
  %3 = xla_tuple %v2
  %4 = xla_tuple %3
  %v5 = vsub.s32 0, %v2
  %6 = xla_tuple %v5
  %7 = vst [vmem:[%s1] sm:$0x1] %v5

// kernel: ter_rnn_encode.1
$region0: #{ter_rnn_encode.1}
  #allocation0 [shape = 'u32[]', space=smem, size = 0x4, offset = 0x4, fixed_abs, tag = 'smem constant byte address 0x4 - core index']
  #allocation1 [shape = 'u32[144,128]{1,0:T(1,128)}', space=vmem, size = 0x12000, scoped, tag = 'internal scratch']
  #allocation2 [shape = 'bf16[8,8,512]{2,1,0:T(8,128)(2,1)}', space=vmem, size = 0x10000, scoped, tag = 'scratch operand']
  #allocation3 [shape = 'bf16[8,128]{1,0:T(8,128)(2,1)}', space=vmem, size = 0x800, scoped, tag = 'scratch operand']
  #allocation4 [shape = 'f32[8,128]{1,0:T(8,128)}', space=vmem, size = 0x1000, scoped, tag = 'scratch operand']
  #allocation5 [shape = 's32[1]{0}', space=sflag, size = 0x4, scoped, tag = 'scoped memory for ter_rnn_encode.1']
  #allocation6 [shape = 's32[1]{0:T(128)S(6)}', space=smem, size = 0x200, scoped, tag = 'prefetched SMEM operand 0']
  %s0 = inlined_call_operand.<no memory space> [shape: s32[1], index: 0, kind: input, shape index: {}]
  %s1 = inlined_call_operand.vmem [shape: s32[8,1], index: 1, kind: input, shape index: {}]
  %s2 = inlined_call_operand.vmem [shape: bf16[8,8,32], index: 2, kind: input, shape index: {}]
  %s3 = inlined_call_operand.vmem [shape: bf16[32,512], index: 3, kind: input, shape index: {}]
  %s4 = inlined_call_operand.vmem [shape: bf16[128,512], index: 4, kind: input, shape index: {}]
  %s5 = inlined_call_operand.vmem [shape: f32[1,512], index: 5, kind: input, shape index: {}]
  %s6 = inlined_call_operand.vmem [shape: f32[8,128], index: 6, kind: output, shape index: {}]
  %s7 = sld [smem:[#allocation0]]
  $region49: #{ter_rnn_encode.1} parent=0
    _
  %s9 = ssub.s32 1, %s7
  %s10 = scalar_select 0, %s9, %s7
  %11 = sst [smem:[#allocation6]] %s0
  // Predicated region
  $region2: #{ter_rnn_encode.1} parent=0 // pred_check
    _
  $region3: #{ter_rnn_encode.1} parent=0 // pred_check_branch
    %13 = sbr.rel (0) target = $region5
  $region4: #{ter_rnn_encode.1} parent=0 // pred_region
    _
  $region5: #{ter_rnn_encode.1} parent=0 // pred_fallthru
    _
  // Predicated region
  $region6: #{ter_rnn_encode.1} parent=0 // pred_check
    _
  $region7: #{ter_rnn_encode.1} parent=0 // pred_check_branch
    %15 = sbr.rel (0) target = $region9
  $region8: #{ter_rnn_encode.1} parent=0 // pred_region
    _
  $region9: #{ter_rnn_encode.1} parent=0 // pred_fallthru
    _
  // Predicated region
  $region10: #{ter_rnn_encode.1} parent=0 // pred_check
    _
  $region11: #{ter_rnn_encode.1} parent=0 // pred_check_branch
    %17 = sbr.rel (0) target = $region13
  $region12: #{ter_rnn_encode.1} parent=0 // pred_region
    _
  $region13: #{ter_rnn_encode.1} parent=0 // pred_fallthru
    _
  // Predicated region
  $region14: #{ter_rnn_encode.1} parent=0 // pred_check
    _
  $region15: #{ter_rnn_encode.1} parent=0 // pred_check_branch
    %19 = sbr.rel (0) target = $region17
  $region16: #{ter_rnn_encode.1} parent=0 // pred_region
    _
  $region17: #{ter_rnn_encode.1} parent=0 // pred_fallthru
    _
  // Predicated region
  $region18: #{ter_rnn_encode.1} parent=0 // pred_check
    _
  $region19: #{ter_rnn_encode.1} parent=0 // pred_check_branch
    %21 = sbr.rel (0) target = $region21
  $region20: #{ter_rnn_encode.1} parent=0 // pred_region
    _
  $region21: #{ter_rnn_encode.1} parent=0 // pred_fallthru
    _
  %p23 = scmp.eq.s32.totalorder 0, 0
  // Predicated region
  $region22: #{ter_rnn_encode.1} parent=0 // pred_check
    %p24 = pneg %p23
  $region23: #{ter_rnn_encode.1} parent=0 // pred_check_branch
    %26 = sbr.rel (%p24) target = $region25
  $region24: #{ter_rnn_encode.1} parent=0 // pred_region
    %27 = vst [vmem:[#allocation3] sm:$0xf] 0
    %28 = vst [vmem:[#allocation4] sm:$0xff] 0.0
  $region25: #{ter_rnn_encode.1} parent=0 // pred_fallthru
    _
  %s29 = sld [smem:[#allocation6]]
  %s30 = smul.u32 0, 8
  %p31 = scmp.lt.s32.totalorder %s30, %s29
  // Predicated region
  $region26: #{ter_rnn_encode.1} parent=0 // pred_check
    %p32 = pneg %p31
  $region27: #{ter_rnn_encode.1} parent=0 // pred_check_branch
    %34 = sbr.rel (%p32) target = $region29
  $region28: #{ter_rnn_encode.1} parent=0 // pred_region
    %v35 = vld [vmem:[%s2] sm:$0xf]
    %v36 = vld [vmem:[%s2 + $0x4] sm:$0xf]
    %v37 = vld [vmem:[%s2 + $0x8] sm:$0xf]
    %v38 = vld [vmem:[%s2 + $0xc] sm:$0xf]
    %v39 = vld [vmem:[%s2 + $0x10] sm:$0xf]
    %v40 = vld [vmem:[%s2 + $0x14] sm:$0xf]
    %v41 = vld [vmem:[%s2 + $0x18] sm:$0xf]
    %v42 = vld [vmem:[%s2 + $0x1c] sm:$0xf]
    %v43 = vld [vmem:[%s3] sm:$0xff]
    %v44 = vld [vmem:[%s3 + $0x8] sm:$0xff]
    %v45 = vld [vmem:[%s3 + $0x10] sm:$0xff]
    %v46 = vld [vmem:[%s3 + $0x18] sm:$0xff]
    %v47 = vld [vmem:[%s3 + $0x20] sm:$0xff]
    %v48 = vld [vmem:[%s3 + $0x28] sm:$0xff]
    %v49 = vld [vmem:[%s3 + $0x30] sm:$0xff]
    %v50 = vld [vmem:[%s3 + $0x38] sm:$0xff]
    %v51 = vld [vmem:[%s5] sm:$0xf]
    %v53 = vlaneseq
    %v54 = vshrl.u32 %v53, 7
    %v55 = vsub.s32 0, %v54
    %v56 = vrot.slane %v51, %v55
    %v57 = vlaneseq
    %v58 = vshrl.u32 %v57, 7
    %v59 = vsub.s32 1, %v58
    %v60 = vrot.slane %v51, %v59
    %v61 = vlaneseq
    %v62 = vshrl.u32 %v61, 7
    %v63 = vsub.s32 2, %v62
    %v64 = vrot.slane %v51, %v63
    %v65 = vlaneseq
    %v66 = vshrl.u32 %v65, 7
    %v67 = vsub.s32 3, %v66
    %v68 = vrot.slane %v51, %v67
    %v81 = vunpack.c.l.b16 %v35
    %v82 = vunpack.c.l.b16 %v36
    %v83 = vunpack.c.l.b16 %v37
    %v84 = vunpack.c.l.b16 %v38
    %v85 = vunpack.c.l.b16 %v39
    %v86 = vunpack.c.l.b16 %v40
    %v87 = vunpack.c.l.b16 %v41
    %v88 = vunpack.c.l.b16 %v42
    %v89 = vpack.c.b16 %v82, %v81
    %v90 = vpack.c.b16 %v84, %v83
    %v91 = vpack.c.b16 %v86, %v85
    %v92 = vpack.c.b16 %v88, %v87
    %v101 = vunpack.c.l.b16 %v43
    %v102 = vunpack.c.h.b16 %v43
    %v103 = vunpack.c.l.b16 %v44
    %v104 = vunpack.c.h.b16 %v44
    %v105 = vunpack.c.l.b16 %v45
    %v106 = vunpack.c.h.b16 %v45
    %v107 = vunpack.c.l.b16 %v46
    %v108 = vunpack.c.h.b16 %v46
    %v109 = vunpack.c.l.b16 %v47
    %v110 = vunpack.c.h.b16 %v47
    %v111 = vunpack.c.l.b16 %v48
    %v112 = vunpack.c.h.b16 %v48
    %v113 = vunpack.c.l.b16 %v49
    %v114 = vunpack.c.h.b16 %v49
    %v115 = vunpack.c.l.b16 %v50
    %v116 = vunpack.c.h.b16 %v50
    %v117 = vpack.c.b16 %v105, %v101
    %v118 = vpack.c.b16 %v106, %v102
    %v119 = vpack.c.b16 %v107, %v103
    %v120 = vpack.c.b16 %v108, %v104
    %v121 = vpack.c.b16 %v113, %v109
    %v122 = vpack.c.b16 %v114, %v110
    %v123 = vpack.c.b16 %v115, %v111
    %v124 = vpack.c.b16 %v116, %v112
    %vm133 = vcmask 261120
    %v135 = vsel %vm133, %v89, 0
    %v138 = vsel %vm133, %v90, 0
    %v141 = vsel %vm133, %v91, 0
    %v144 = vsel %vm133, %v92, 0
    %146 = vmatprep.subr.bf16.mxu0 %v118
    %147 = vmatpush1.bf16.msra.mxu0 %v117
    %148 = vmatprep.subr.bf16.mxu0 %v122
    %149 = vmatpush1.bf16.msra.mxu0 %v121
    %150 = vmatprep.subr.bf16.mxu0 0
    %151 = vmatpush1.bf16.msra.mxu0 0
    %152 = vmatprep.subr.bf16.mxu0 0
    %153 = vmatpush1.bf16.msra.mxu0 0
    %154 = vmatprep.subr.bf16.mxu0 0
    %155 = vmatpush1.bf16.msra.mxu0 0
    %156 = vmatprep.subr.bf16.mxu0 0
    %157 = vmatpush1.bf16.msra.mxu0 0
    %158 = vmatprep.subr.bf16.mxu0 0
    %159 = vmatpush1.bf16.msra.mxu0 0
    %160 = vmatprep.subr.bf16.mxu0 0
    %161 = vmatpush1.bf16.msra.mxu0 0
    %162 = vmatprep.subr.bf16.mxu0 0
    %163 = vmatpush1.bf16.msra.mxu0 0
    %164 = vmatprep.subr.bf16.mxu0 0
    %165 = vmatpush1.bf16.msra.mxu0 0
    %166 = vmatprep.subr.bf16.mxu0 0
    %167 = vmatpush1.bf16.msra.mxu0 0
    %168 = vmatprep.subr.bf16.mxu0 0
    %169 = vmatpush1.bf16.msra.mxu0 0
    %170 = vmatprep.subr.bf16.mxu0 0
    %171 = vmatpush1.bf16.msra.mxu0 0
    %172 = vmatprep.subr.bf16.mxu0 0
    %173 = vmatpush1.bf16.msra.mxu0 0
    %174 = vmatprep.subr.bf16.mxu0 0
    %175 = vmatpush1.bf16.msra.mxu0 0
    %176 = vmatprep.subr.bf16.mxu0 0
    %177 = vmatpush1.bf16.msra.mxu0 0
    %178 = vmatprep.mubr.bf16.mxu0 0
    %179 = vmatmul.mubr.bf16.gmra.mrb[0].mxu0 %v135
    %v180 = vpop.f32.mrb[0].mxu0
    %v181 = vadd.f32 %v56, %v180
    %v182 = vpop.f32.mrb[0].mxu0
    %v183 = vadd.f32 %v60, %v182
    %v184 = vpop.f32.mrb[0].mxu0
    %v185 = vadd.f32 %v56, %v184
    %v186 = vpop.f32.mrb[0].mxu0
    %v187 = vadd.f32 %v60, %v186
    %188 = vmatprep.mubr.bf16.mxu0 0
    %189 = vmatmul.mubr.bf16.gmra.mrb[0].mxu0 %v138
    %v190 = vpop.f32.mrb[0].mxu0
    %v191 = vadd.f32 %v56, %v190
    %v192 = vpop.f32.mrb[0].mxu0
    %v193 = vadd.f32 %v60, %v192
    %v194 = vpop.f32.mrb[0].mxu0
    %v195 = vadd.f32 %v56, %v194
    %v196 = vpop.f32.mrb[0].mxu0
    %v197 = vadd.f32 %v60, %v196
    %198 = vmatprep.mubr.bf16.mxu0 0
    %199 = vmatmul.mubr.bf16.gmra.mrb[0].mxu0 %v141
    %v200 = vpop.f32.mrb[0].mxu0
    %v201 = vadd.f32 %v56, %v200
    %v202 = vpop.f32.mrb[0].mxu0
    %v203 = vadd.f32 %v60, %v202
    %v204 = vpop.f32.mrb[0].mxu0
    %v205 = vadd.f32 %v56, %v204
    %v206 = vpop.f32.mrb[0].mxu0
    %v207 = vadd.f32 %v60, %v206
    %208 = vmatprep.mubr.bf16.mxu0 0
    %209 = vmatmul.mubr.bf16.gmra.mrb[0].mxu0 %v144
    %v210 = vpop.f32.mrb[0].mxu0
    %v211 = vadd.f32 %v56, %v210
    %v212 = vpop.f32.mrb[0].mxu0
    %v213 = vadd.f32 %v60, %v212
    %v214 = vpop.f32.mrb[0].mxu0
    %v215 = vadd.f32 %v56, %v214
    %v216 = vpop.f32.mrb[0].mxu0
    %v217 = vadd.f32 %v60, %v216
    %218 = vdwg.mxu0
    %219 = vmatprep.subr.bf16.mxu0 %v120
    %220 = vmatpush1.bf16.msra.mxu0 %v119
    %221 = vmatprep.subr.bf16.mxu0 %v124
    %222 = vmatpush1.bf16.msra.mxu0 %v123
    %223 = vmatprep.subr.bf16.mxu0 0
    %224 = vmatpush1.bf16.msra.mxu0 0
    %225 = vmatprep.subr.bf16.mxu0 0
    %226 = vmatpush1.bf16.msra.mxu0 0
    %227 = vmatprep.subr.bf16.mxu0 0
    %228 = vmatpush1.bf16.msra.mxu0 0
    %229 = vmatprep.subr.bf16.mxu0 0
    %230 = vmatpush1.bf16.msra.mxu0 0
    %231 = vmatprep.subr.bf16.mxu0 0
    %232 = vmatpush1.bf16.msra.mxu0 0
    %233 = vmatprep.subr.bf16.mxu0 0
    %234 = vmatpush1.bf16.msra.mxu0 0
    %235 = vmatprep.subr.bf16.mxu0 0
    %236 = vmatpush1.bf16.msra.mxu0 0
    %237 = vmatprep.subr.bf16.mxu0 0
    %238 = vmatpush1.bf16.msra.mxu0 0
    %239 = vmatprep.subr.bf16.mxu0 0
    %240 = vmatpush1.bf16.msra.mxu0 0
    %241 = vmatprep.subr.bf16.mxu0 0
    %242 = vmatpush1.bf16.msra.mxu0 0
    %243 = vmatprep.subr.bf16.mxu0 0
    %244 = vmatpush1.bf16.msra.mxu0 0
    %245 = vmatprep.subr.bf16.mxu0 0
    %246 = vmatpush1.bf16.msra.mxu0 0
    %247 = vmatprep.subr.bf16.mxu0 0
    %248 = vmatpush1.bf16.msra.mxu0 0
    %249 = vmatprep.subr.bf16.mxu0 0
    %250 = vmatpush1.bf16.msra.mxu0 0
    %251 = vmatprep.mubr.bf16.mxu0 0
    %252 = vmatmul.mubr.bf16.gmra.mrb[0].mxu0 %v135
    %v253 = vpop.f32.mrb[0].mxu0
    %v254 = vadd.f32 %v64, %v253
    %v255 = vpop.f32.mrb[0].mxu0
    %v256 = vadd.f32 %v68, %v255
    %v257 = vpop.f32.mrb[0].mxu0
    %v258 = vadd.f32 %v64, %v257
    %v259 = vpop.f32.mrb[0].mxu0
    %v260 = vadd.f32 %v68, %v259
    %261 = vmatprep.mubr.bf16.mxu0 0
    %262 = vmatmul.mubr.bf16.gmra.mrb[0].mxu0 %v138
    %v263 = vpop.f32.mrb[0].mxu0
    %v264 = vadd.f32 %v64, %v263
    %v265 = vpop.f32.mrb[0].mxu0
    %v266 = vadd.f32 %v68, %v265
    %v267 = vpop.f32.mrb[0].mxu0
    %v268 = vadd.f32 %v64, %v267
    %v269 = vpop.f32.mrb[0].mxu0
    %v270 = vadd.f32 %v68, %v269
    %271 = vmatprep.mubr.bf16.mxu0 0
    %272 = vmatmul.mubr.bf16.gmra.mrb[0].mxu0 %v141
    %v273 = vpop.f32.mrb[0].mxu0
    %v274 = vadd.f32 %v64, %v273
    %v275 = vpop.f32.mrb[0].mxu0
    %v276 = vadd.f32 %v68, %v275
    %v277 = vpop.f32.mrb[0].mxu0
    %v278 = vadd.f32 %v64, %v277
    %v279 = vpop.f32.mrb[0].mxu0
    %v280 = vadd.f32 %v68, %v279
    %281 = vmatprep.mubr.bf16.mxu0 0
    %282 = vmatmul.mubr.bf16.gmra.mrb[0].mxu0 %v144
    %v283 = vpop.f32.mrb[0].mxu0
    %v284 = vadd.f32 %v64, %v283
    %v285 = vpop.f32.mrb[0].mxu0
    %v286 = vadd.f32 %v68, %v285
    %v287 = vpop.f32.mrb[0].mxu0
    %v288 = vadd.f32 %v64, %v287
    %v289 = vpop.f32.mrb[0].mxu0
    %v290 = vadd.f32 %v68, %v289
    %291 = vdwg.mxu0
    %v292 = vpack.c.bf16 %v185, %v181
    %v293 = vpack.c.bf16 %v187, %v183
    %v294 = vpack.c.bf16 %v258, %v254
    %v295 = vpack.c.bf16 %v260, %v256
    %v296 = vpack.c.bf16 %v195, %v191
    %v297 = vpack.c.bf16 %v197, %v193
    %v298 = vpack.c.bf16 %v268, %v264
    %v299 = vpack.c.bf16 %v270, %v266
    %v300 = vpack.c.bf16 %v205, %v201
    %v301 = vpack.c.bf16 %v207, %v203
    %v302 = vpack.c.bf16 %v278, %v274
    %v303 = vpack.c.bf16 %v280, %v276
    %v304 = vpack.c.bf16 %v215, %v211
    %v305 = vpack.c.bf16 %v217, %v213
    %v306 = vpack.c.bf16 %v288, %v284
    %v307 = vpack.c.bf16 %v290, %v286
    %v324 = vunpack.c.l.b16 %v292
    %v325 = vunpack.c.l.b16 %v293
    %v326 = vunpack.c.l.b16 %v294
    %v327 = vunpack.c.l.b16 %v295
    %v328 = vunpack.c.h.b16 %v292
    %v329 = vunpack.c.h.b16 %v293
    %v330 = vunpack.c.h.b16 %v294
    %v331 = vunpack.c.h.b16 %v295
    %v332 = vunpack.c.l.b16 %v296
    %v333 = vunpack.c.l.b16 %v297
    %v334 = vunpack.c.l.b16 %v298
    %v335 = vunpack.c.l.b16 %v299
    %v336 = vunpack.c.h.b16 %v296
    %v337 = vunpack.c.h.b16 %v297
    %v338 = vunpack.c.h.b16 %v298
    %v339 = vunpack.c.h.b16 %v299
    %v340 = vunpack.c.l.b16 %v300
    %v341 = vunpack.c.l.b16 %v301
    %v342 = vunpack.c.l.b16 %v302
    %v343 = vunpack.c.l.b16 %v303
    %v344 = vunpack.c.h.b16 %v300
    %v345 = vunpack.c.h.b16 %v301
    %v346 = vunpack.c.h.b16 %v302
    %v347 = vunpack.c.h.b16 %v303
    %v348 = vunpack.c.l.b16 %v304
    %v349 = vunpack.c.l.b16 %v305
    %v350 = vunpack.c.l.b16 %v306
    %v351 = vunpack.c.l.b16 %v307
    %v352 = vunpack.c.h.b16 %v304
    %v353 = vunpack.c.h.b16 %v305
    %v354 = vunpack.c.h.b16 %v306
    %v355 = vunpack.c.h.b16 %v307
    %v356 = vpack.c.b16 %v325, %v324
    %v357 = vpack.c.b16 %v327, %v326
    %v358 = vpack.c.b16 %v329, %v328
    %v359 = vpack.c.b16 %v331, %v330
    %v360 = vpack.c.b16 %v333, %v332
    %v361 = vpack.c.b16 %v335, %v334
    %v362 = vpack.c.b16 %v337, %v336
    %v363 = vpack.c.b16 %v339, %v338
    %v364 = vpack.c.b16 %v341, %v340
    %v365 = vpack.c.b16 %v343, %v342
    %v366 = vpack.c.b16 %v345, %v344
    %v367 = vpack.c.b16 %v347, %v346
    %v368 = vpack.c.b16 %v349, %v348
    %v369 = vpack.c.b16 %v351, %v350
    %v370 = vpack.c.b16 %v353, %v352
    %v371 = vpack.c.b16 %v355, %v354
    %388 = vst [vmem:[#allocation2] sm:$0xff] %v356
    %389 = vst [vmem:[#allocation2 + $0x8] sm:$0xff] %v357
    %390 = vst [vmem:[#allocation2 + $0x10] sm:$0xff] %v358
    %391 = vst [vmem:[#allocation2 + $0x18] sm:$0xff] %v359
    %392 = vst [vmem:[#allocation2 + $0x20] sm:$0xff] %v360
    %393 = vst [vmem:[#allocation2 + $0x28] sm:$0xff] %v361
    %394 = vst [vmem:[#allocation2 + $0x30] sm:$0xff] %v362
    %395 = vst [vmem:[#allocation2 + $0x38] sm:$0xff] %v363
    %396 = vst [vmem:[#allocation2 + $0x40] sm:$0xff] %v364
    %397 = vst [vmem:[#allocation2 + $0x48] sm:$0xff] %v365
    %398 = vst [vmem:[#allocation2 + $0x50] sm:$0xff] %v366
    %399 = vst [vmem:[#allocation2 + $0x58] sm:$0xff] %v367
    %400 = vst [vmem:[#allocation2 + $0x60] sm:$0xff] %v368
    %401 = vst [vmem:[#allocation2 + $0x68] sm:$0xff] %v369
    %402 = vst [vmem:[#allocation2 + $0x70] sm:$0xff] %v370
    %403 = vst [vmem:[#allocation2 + $0x78] sm:$0xff] %v371
    %v404 = vld [vmem:[%s1] sm:$0xff]
    %v405 = vld [vmem:[%s4] sm:$0xff]
    %v406 = vld [vmem:[%s4 + $0x8] sm:$0xff]
    %v407 = vld [vmem:[%s4 + $0x10] sm:$0xff]
    %v408 = vld [vmem:[%s4 + $0x18] sm:$0xff]
    %v409 = vld [vmem:[%s4 + $0x20] sm:$0xff]
    %v410 = vld [vmem:[%s4 + $0x28] sm:$0xff]
    %v411 = vld [vmem:[%s4 + $0x30] sm:$0xff]
    %v412 = vld [vmem:[%s4 + $0x38] sm:$0xff]
    %v413 = vld [vmem:[%s4 + $0x40] sm:$0xff]
    %v414 = vld [vmem:[%s4 + $0x48] sm:$0xff]
    %v415 = vld [vmem:[%s4 + $0x50] sm:$0xff]
    %v416 = vld [vmem:[%s4 + $0x58] sm:$0xff]
    %v417 = vld [vmem:[%s4 + $0x60] sm:$0xff]
    %v418 = vld [vmem:[%s4 + $0x68] sm:$0xff]
    %v419 = vld [vmem:[%s4 + $0x70] sm:$0xff]
    %v420 = vld [vmem:[%s4 + $0x78] sm:$0xff]
    %v421 = vld [vmem:[%s4 + $0x80] sm:$0xff]
    %v422 = vld [vmem:[%s4 + $0x88] sm:$0xff]
    %v423 = vld [vmem:[%s4 + $0x90] sm:$0xff]
    %v424 = vld [vmem:[%s4 + $0x98] sm:$0xff]
    %v425 = vld [vmem:[%s4 + $0xa0] sm:$0xff]
    %v426 = vld [vmem:[%s4 + $0xa8] sm:$0xff]
    %v427 = vld [vmem:[%s4 + $0xb0] sm:$0xff]
    %v428 = vld [vmem:[%s4 + $0xb8] sm:$0xff]
    %v429 = vld [vmem:[%s4 + $0xc0] sm:$0xff]
    %v430 = vld [vmem:[%s4 + $0xc8] sm:$0xff]
    %v431 = vld [vmem:[%s4 + $0xd0] sm:$0xff]
    %v432 = vld [vmem:[%s4 + $0xd8] sm:$0xff]
    %v433 = vld [vmem:[%s4 + $0xe0] sm:$0xff]
    %v434 = vld [vmem:[%s4 + $0xe8] sm:$0xff]
    %v435 = vld [vmem:[%s4 + $0xf0] sm:$0xff]
    %v436 = vld [vmem:[%s4 + $0xf8] sm:$0xff]
    %s437 = ssub.s32 %s29, %s30
    %p438 = scmp.lt.s32.totalorder %s437, 8
    %s439 = scalar_select %p438, %s437, 8
    %v440 = vld [vmem:[#allocation3] sm:$0xf]
    %v441 = vld [vmem:[#allocation4] sm:$0xff]
    // While loop
    $region30: #{ter_rnn_encode.1} parent=28 // loop_pre_header
      _
    $region31: #{ter_rnn_encode.1} parent=28 // loop_header
      %s443 = sphi 0, %s445
      %p444 = scmp.ge.s32.totalorder %s443, %s439
      %v448 = vphi %v440, %v739
      %v449 = vphi %v441, %v740
    $region32: #{ter_rnn_encode.1} parent=28 // loop_header_branch
      %447 = sbr.rel (%p444) target = $region36
    $region33: #{ter_rnn_encode.1} parent=28 // loop_body
      %s450 = smul.u32 %s443, 4
      %s451 = smul.addr %s450, 4
      %s452 = scalar_lea.vmem [#allocation2], %s451
      %v453 = vld [vmem:[%s452] sm:$0xff]
      %v454 = vld [vmem:[%s452 + $0x8] sm:$0xff]
      %v455 = vunpack.c.l.bf16 %v453
      %v456 = vunpack.c.h.bf16 %v453
      %v457 = vunpack.c.l.bf16 %v454
      %v458 = vunpack.c.h.bf16 %v454
      %v491 = vunpack.c.l.b16 %v405
      %v492 = vunpack.c.h.b16 %v405
      %v493 = vunpack.c.l.b16 %v406
      %v494 = vunpack.c.h.b16 %v406
      %v495 = vunpack.c.l.b16 %v407
      %v496 = vunpack.c.h.b16 %v407
      %v497 = vunpack.c.l.b16 %v408
      %v498 = vunpack.c.h.b16 %v408
      %v499 = vunpack.c.l.b16 %v409
      %v500 = vunpack.c.h.b16 %v409
      %v501 = vunpack.c.l.b16 %v410
      %v502 = vunpack.c.h.b16 %v410
      %v503 = vunpack.c.l.b16 %v411
      %v504 = vunpack.c.h.b16 %v411
      %v505 = vunpack.c.l.b16 %v412
      %v506 = vunpack.c.h.b16 %v412
      %v507 = vunpack.c.l.b16 %v413
      %v508 = vunpack.c.h.b16 %v413
      %v509 = vunpack.c.l.b16 %v414
      %v510 = vunpack.c.h.b16 %v414
      %v511 = vunpack.c.l.b16 %v415
      %v512 = vunpack.c.h.b16 %v415
      %v513 = vunpack.c.l.b16 %v416
      %v514 = vunpack.c.h.b16 %v416
      %v515 = vunpack.c.l.b16 %v417
      %v516 = vunpack.c.h.b16 %v417
      %v517 = vunpack.c.l.b16 %v418
      %v518 = vunpack.c.h.b16 %v418
      %v519 = vunpack.c.l.b16 %v419
      %v520 = vunpack.c.h.b16 %v419
      %v521 = vunpack.c.l.b16 %v420
      %v522 = vunpack.c.h.b16 %v420
      %v523 = vunpack.c.l.b16 %v421
      %v524 = vunpack.c.h.b16 %v421
      %v525 = vunpack.c.l.b16 %v422
      %v526 = vunpack.c.h.b16 %v422
      %v527 = vunpack.c.l.b16 %v423
      %v528 = vunpack.c.h.b16 %v423
      %v529 = vunpack.c.l.b16 %v424
      %v530 = vunpack.c.h.b16 %v424
      %v531 = vunpack.c.l.b16 %v425
      %v532 = vunpack.c.h.b16 %v425
      %v533 = vunpack.c.l.b16 %v426
      %v534 = vunpack.c.h.b16 %v426
      %v535 = vunpack.c.l.b16 %v427
      %v536 = vunpack.c.h.b16 %v427
      %v537 = vunpack.c.l.b16 %v428
      %v538 = vunpack.c.h.b16 %v428
      %v539 = vunpack.c.l.b16 %v429
      %v540 = vunpack.c.h.b16 %v429
      %v541 = vunpack.c.l.b16 %v430
      %v542 = vunpack.c.h.b16 %v430
      %v543 = vunpack.c.l.b16 %v431
      %v544 = vunpack.c.h.b16 %v431
      %v545 = vunpack.c.l.b16 %v432
      %v546 = vunpack.c.h.b16 %v432
      %v547 = vunpack.c.l.b16 %v433
      %v548 = vunpack.c.h.b16 %v433
      %v549 = vunpack.c.l.b16 %v434
      %v550 = vunpack.c.h.b16 %v434
      %v551 = vunpack.c.l.b16 %v435
      %v552 = vunpack.c.h.b16 %v435
      %v553 = vunpack.c.l.b16 %v436
      %v554 = vunpack.c.h.b16 %v436
      %v555 = vpack.c.b16 %v495, %v491
      %v556 = vpack.c.b16 %v496, %v492
      %v557 = vpack.c.b16 %v497, %v493
      %v558 = vpack.c.b16 %v498, %v494
      %v559 = vpack.c.b16 %v503, %v499
      %v560 = vpack.c.b16 %v504, %v500
      %v561 = vpack.c.b16 %v505, %v501
      %v562 = vpack.c.b16 %v506, %v502
      %v563 = vpack.c.b16 %v511, %v507
      %v564 = vpack.c.b16 %v512, %v508
      %v565 = vpack.c.b16 %v513, %v509
      %v566 = vpack.c.b16 %v514, %v510
      %v567 = vpack.c.b16 %v519, %v515
      %v568 = vpack.c.b16 %v520, %v516
      %v569 = vpack.c.b16 %v521, %v517
      %v570 = vpack.c.b16 %v522, %v518
      %v571 = vpack.c.b16 %v527, %v523
      %v572 = vpack.c.b16 %v528, %v524
      %v573 = vpack.c.b16 %v529, %v525
      %v574 = vpack.c.b16 %v530, %v526
      %v575 = vpack.c.b16 %v535, %v531
      %v576 = vpack.c.b16 %v536, %v532
      %v577 = vpack.c.b16 %v537, %v533
      %v578 = vpack.c.b16 %v538, %v534
      %v579 = vpack.c.b16 %v543, %v539
      %v580 = vpack.c.b16 %v544, %v540
      %v581 = vpack.c.b16 %v545, %v541
      %v582 = vpack.c.b16 %v546, %v542
      %v583 = vpack.c.b16 %v551, %v547
      %v584 = vpack.c.b16 %v552, %v548
      %v585 = vpack.c.b16 %v553, %v549
      %v586 = vpack.c.b16 %v554, %v550
      %619 = vmatprep.subr.bf16.mxu0 %v556
      %620 = vmatpush1.bf16.msra.mxu0 %v555
      %621 = vmatprep.subr.bf16.mxu0 %v560
      %622 = vmatpush1.bf16.msra.mxu0 %v559
      %623 = vmatprep.subr.bf16.mxu0 %v564
      %624 = vmatpush1.bf16.msra.mxu0 %v563
      %625 = vmatprep.subr.bf16.mxu0 %v568
      %626 = vmatpush1.bf16.msra.mxu0 %v567
      %627 = vmatprep.subr.bf16.mxu0 %v572
      %628 = vmatpush1.bf16.msra.mxu0 %v571
      %629 = vmatprep.subr.bf16.mxu0 %v576
      %630 = vmatpush1.bf16.msra.mxu0 %v575
      %631 = vmatprep.subr.bf16.mxu0 %v580
      %632 = vmatpush1.bf16.msra.mxu0 %v579
      %633 = vmatprep.subr.bf16.mxu0 %v584
      %634 = vmatpush1.bf16.msra.mxu0 %v583
      %635 = vmatprep.subr.bf16.mxu0 0
      %636 = vmatpush1.bf16.msra.mxu0 0
      %637 = vmatprep.subr.bf16.mxu0 0
      %638 = vmatpush1.bf16.msra.mxu0 0
      %639 = vmatprep.subr.bf16.mxu0 0
      %640 = vmatpush1.bf16.msra.mxu0 0
      %641 = vmatprep.subr.bf16.mxu0 0
      %642 = vmatpush1.bf16.msra.mxu0 0
      %643 = vmatprep.subr.bf16.mxu0 0
      %644 = vmatpush1.bf16.msra.mxu0 0
      %645 = vmatprep.subr.bf16.mxu0 0
      %646 = vmatpush1.bf16.msra.mxu0 0
      %647 = vmatprep.subr.bf16.mxu0 0
      %648 = vmatpush1.bf16.msra.mxu0 0
      %649 = vmatprep.subr.bf16.mxu0 0
      %650 = vmatpush1.bf16.msra.mxu0 0
      %651 = vmatprep.mubr.bf16.mxu0 0
      %652 = vmatmul.mubr.bf16.gmra.mrb[0].mxu0 %v448
      %v653 = vpop.f32.mrb[0].mxu0
      %v654 = vadd.f32 0.0, %v653
      %v655 = vpop.f32.mrb[0].mxu0
      %v656 = vadd.f32 0.0, %v655
      %v657 = vpop.f32.mrb[0].mxu0
      %v658 = vpop.f32.mrb[0].mxu0
      %659 = vdwg.mxu0
      %660 = vmatprep.subr.bf16.mxu0 %v558
      %661 = vmatpush1.bf16.msra.mxu0 %v557
      %662 = vmatprep.subr.bf16.mxu0 %v562
      %663 = vmatpush1.bf16.msra.mxu0 %v561
      %664 = vmatprep.subr.bf16.mxu0 %v566
      %665 = vmatpush1.bf16.msra.mxu0 %v565
      %666 = vmatprep.subr.bf16.mxu0 %v570
      %667 = vmatpush1.bf16.msra.mxu0 %v569
      %668 = vmatprep.subr.bf16.mxu0 %v574
      %669 = vmatpush1.bf16.msra.mxu0 %v573
      %670 = vmatprep.subr.bf16.mxu0 %v578
      %671 = vmatpush1.bf16.msra.mxu0 %v577
      %672 = vmatprep.subr.bf16.mxu0 %v582
      %673 = vmatpush1.bf16.msra.mxu0 %v581
      %674 = vmatprep.subr.bf16.mxu0 %v586
      %675 = vmatpush1.bf16.msra.mxu0 %v585
      %676 = vmatprep.subr.bf16.mxu0 0
      %677 = vmatpush1.bf16.msra.mxu0 0
      %678 = vmatprep.subr.bf16.mxu0 0
      %679 = vmatpush1.bf16.msra.mxu0 0
      %680 = vmatprep.subr.bf16.mxu0 0
      %681 = vmatpush1.bf16.msra.mxu0 0
      %682 = vmatprep.subr.bf16.mxu0 0
      %683 = vmatpush1.bf16.msra.mxu0 0
      %684 = vmatprep.subr.bf16.mxu0 0
      %685 = vmatpush1.bf16.msra.mxu0 0
      %686 = vmatprep.subr.bf16.mxu0 0
      %687 = vmatpush1.bf16.msra.mxu0 0
      %688 = vmatprep.subr.bf16.mxu0 0
      %689 = vmatpush1.bf16.msra.mxu0 0
      %690 = vmatprep.subr.bf16.mxu0 0
      %691 = vmatpush1.bf16.msra.mxu0 0
      %692 = vmatprep.mubr.bf16.mxu0 0
      %693 = vmatmul.mubr.bf16.gmra.mrb[0].mxu0 %v448
      %v694 = vpop.f32.mrb[0].mxu0
      %v695 = vadd.f32 0.0, %v694
      %v696 = vpop.f32.mrb[0].mxu0
      %v697 = vadd.f32 0.0, %v696
      %v698 = vpop.f32.mrb[0].mxu0
      %v699 = vpop.f32.mrb[0].mxu0
      %700 = vdwg.mxu0
      %v701 = vadd.f32 %v455, %v654
      %v702 = vadd.f32 %v456, %v656
      %v703 = vadd.f32 %v457, %v695
      %v704 = vadd.f32 %v458, %v697
      %v705 = vxor.u32 %v701, 2147483648
      %v706 = vmul.f32 %v705, 1.442695
      %v707 = vpow.pop %v706
      %v708 = vadd.f32 %v707, 1.0
      %v709 = vrcp.pop %v708
      %v710 = vmul.f32 1.0, %v709
      %v711 = vxor.u32 %v702, 2147483648
      %v712 = vmul.f32 %v711, 1.442695
      %v713 = vpow.pop %v712
      %v714 = vadd.f32 %v713, 1.0
      %v715 = vrcp.pop %v714
      %v716 = vmul.f32 1.0, %v715
      %v717 = vtanh.pop %v703
      %v718 = vxor.u32 %v704, 2147483648
      %v719 = vmul.f32 %v718, 1.442695
      %v720 = vpow.pop %v719
      %v721 = vadd.f32 %v720, 1.0
      %v722 = vrcp.pop %v721
      %v723 = vmul.f32 1.0, %v722
      %v724 = vmul.f32 %v716, %v449
      %v725 = vmul.f32 %v710, %v717
      %v726 = vadd.f32 %v724, %v725
      %v727 = vtanh.pop %v726
      %v728 = vmul.f32 %v723, %v727
      %s729 = sadd.s32 %s30, %s443
      %v730 = vstv %s729
      %vm731 = vcmp.lt.s32.totalorder %v730, %v404
      %v732 = vpack.c.bf16 %v728, %v728
      %v733 = vsel %vm731, 1, 0
      %734 = vset.pattern.permute.xlu0 0
      %735 = vperm.xlu0 %734, %v733
      %v736 = vpop.permute.xlu0 %735
      %vm737 = vcmp.eq.s32.totalorder %v736, 1
      %vm738 = vmpackc.low %vm737, %vm737
      %v739 = vsel %vm738, %v732, %v448
      %v740 = vsel %vm737, %v726, %v449
    $region34: #{ter_rnn_encode.1} parent=28 // loop_footer
      %s445 = sadd.s32 %s443, 1
    $region35: #{ter_rnn_encode.1} parent=28 // loop_footer_branch
      %442 = sbr.rel target = $region31
    $region36: #{ter_rnn_encode.1} parent=28 // loop_exit
      _
    %741 = vst [vmem:[#allocation3] sm:$0xf] %v448
    %742 = vst [vmem:[#allocation4] sm:$0xff] %v449
  $region29: #{ter_rnn_encode.1} parent=0 // pred_fallthru
    _
  // Predicated region
  $region37: #{ter_rnn_encode.1} parent=0 // pred_check
    %p743 = pneg %p23
  $region38: #{ter_rnn_encode.1} parent=0 // pred_check_branch
    %745 = sbr.rel (%p743) target = $region40
  $region39: #{ter_rnn_encode.1} parent=0 // pred_region
    %v746 = vld [vmem:[#allocation3] sm:$0xf]
    %v747 = vunpack.c.l.bf16 %v746
    %748 = vst [vmem:[%s6] sm:$0xff] %v747
  $region40: #{ter_rnn_encode.1} parent=0 // pred_fallthru
    _
  // Predicated region
  $region41: #{ter_rnn_encode.1} parent=0 // pred_check
    _
  $region42: #{ter_rnn_encode.1} parent=0 // pred_check_branch
    %750 = sbr.rel (0) target = $region44
  $region43: #{ter_rnn_encode.1} parent=0 // pred_region
    _
  $region44: #{ter_rnn_encode.1} parent=0 // pred_fallthru
    _
  // Predicated region
  $region45: #{ter_rnn_encode.1} parent=0 // pred_check
    _
  $region46: #{ter_rnn_encode.1} parent=0 // pred_check_branch
    %752 = sbr.rel (0) target = $region48
  $region47: #{ter_rnn_encode.1} parent=0 // pred_region
    _
  $region48: #{ter_rnn_encode.1} parent=0 // pred_fallthru
    _

</llo_original>
